<compile_context>
chip_gen: v6e
topology: v6e:2x2x1
jax: 0.10.0
libtpu: 0.0.40
codegen_flags: <defaults>
</compile_context>

<pallas_src>
import jax
import jax.numpy as jnp
from jax.experimental import pallas as pl
from jax.experimental.pallas import tpu as pltpu


def linear_kernel(xt_ref, w_ref, b_ref, o_ref):
    # xt_ref: (IN=2, B) in VMEM  -- batch on the lane axis (lane-dense)
    # w_ref:  (1, 2)    in SMEM  -- torch Linear weight (OUT, IN)
    # b_ref:  (1, 1)    in SMEM  -- torch Linear bias
    # o_ref:  (1, B)    in VMEM  -- lane-dense output row
    w00 = w_ref[0, 0]
    w01 = w_ref[0, 1]
    b = b_ref[0, 0]
    # Pure VPU: scalar-broadcast multiplies + adds, no MXU fill/drain, no XLU.
    y = xt_ref[0:1, :] * w00 + xt_ref[1:2, :] * w01 + b
    o_ref[...] = y.astype(o_ref.dtype)


def one_layer_net(x, weight, bias):
    """Forward pass of OneLayerNet: y = x @ W.T + b.

    x: (B, 2) float32, weight: (1, 2), bias: (1,). Returns (B, 1).
    """
    B, IN = x.shape
    OUT = weight.shape[0]  # = 1 for this module

    # Present batch on the lane axis so the kernel's output store is lane-dense.
    x_t = x.T                      # (IN, B)
    b2d = bias.reshape(1, OUT)     # (1, 1) scalar for SMEM

    y_t = pl.pallas_call(
        linear_kernel,
        out_shape=jax.ShapeDtypeStruct((OUT, B), x.dtype),
        in_specs=[
            pl.BlockSpec(memory_space=pltpu.MemorySpace.VMEM),   # x_t (whole array)
            pl.BlockSpec(memory_space=pltpu.MemorySpace.SMEM),   # weight scalars
            pl.BlockSpec(memory_space=pltpu.MemorySpace.SMEM),   # bias scalar
        ],
        out_specs=pl.BlockSpec(memory_space=pltpu.MemorySpace.VMEM),
    )(x_t, weight, b2d)

    # (1, B) -> (B, 1); trivial layout fix outside the kernel.
    return y_t.T
    # TODO(synk): if batch ever grows to many thousands of rows, add a grid
    # over the batch (lane) axis with a "parallel" dimension_semantics so v7x
    # can shard steps across its two TensorCores.


if __name__ == "__main__":
    key = jax.random.PRNGKey(0)
    kx, kw, kb = jax.random.split(key, 3)

    batch, in_features, out_features = 8, 2, 1

    # Deterministic synthetic inputs/params (PyTorch Linear shapes: W (1,2), b (1,)).
    x = jax.random.normal(kx, (batch, in_features), dtype=jnp.float32)
    weight = jax.random.normal(kw, (out_features, in_features), dtype=jnp.float32)
    bias = jax.random.normal(kb, (out_features,), dtype=jnp.float32)

    y = one_layer_net(x, weight, bias)
    jax.block_until_ready(y)

    # Reference check against plain JAX (same semantics as torch nn.Linear).
    y_ref = x @ weight.T + bias
    assert y.shape == (batch, out_features)
    assert jnp.allclose(y, y_ref, atol=1e-5, rtol=1e-5)

    print("KERNEL_OK")
</pallas_src>

<mosaic_0001>
module attributes {stable_mosaic.version = 11 : i64} {
  func.func @linear_kernel(%arg0: memref<2x8xf32, #tpu.memory_space<vmem>>, %arg1: memref<1x2xf32, #tpu.memory_space<smem>>, %arg2: memref<1x1xf32, #tpu.memory_space<smem>>, %arg3: memref<1x8xf32, #tpu.memory_space<vmem>>) attributes {dimension_semantics = [], scalar_prefetch = 0 : i64, scratch_operands = 0 : i64, tpu.core_type = #tpu.core_type<tc>} {
    %c0 = arith.constant 0 : index
    %c0_0 = arith.constant 0 : index
    %0 = memref.load %arg1[%c0, %c0_0] : memref<1x2xf32, #tpu.memory_space<smem>>
    %c0_1 = arith.constant 0 : index
    %c1 = arith.constant 1 : index
    %1 = memref.load %arg1[%c0_1, %c1] : memref<1x2xf32, #tpu.memory_space<smem>>
    %c0_2 = arith.constant 0 : index
    %c0_3 = arith.constant 0 : index
    %2 = memref.load %arg2[%c0_2, %c0_3] : memref<1x1xf32, #tpu.memory_space<smem>>
    %c0_4 = arith.constant 0 : index
    %c0_5 = arith.constant 0 : index
    %3 = vector.load %arg0[%c0_4, %c0_5] : memref<2x8xf32, #tpu.memory_space<vmem>>, vector<1x8xf32>
    %4 = vector.broadcast %0 : f32 to vector<1x8xf32>
    %5 = arith.mulf %3, %4 : vector<1x8xf32>
    %c1_6 = arith.constant 1 : index
    %c0_7 = arith.constant 0 : index
    %6 = vector.load %arg0[%c1_6, %c0_7] : memref<2x8xf32, #tpu.memory_space<vmem>>, vector<1x8xf32>
    %7 = vector.broadcast %1 : f32 to vector<1x8xf32>
    %8 = arith.mulf %6, %7 : vector<1x8xf32>
    %9 = arith.addf %5, %8 : vector<1x8xf32>
    %10 = vector.broadcast %2 : f32 to vector<1x8xf32>
    %11 = arith.addf %9, %10 : vector<1x8xf32>
    %c0_8 = arith.constant 0 : index
    %c0_9 = arith.constant 0 : index
    %12 = vector.load %arg3[%c0_8, %c0_9] : memref<1x8xf32, #tpu.memory_space<vmem>>, vector<1x8xf32>
    tpu.vector_store %arg3[%c0_8, %c0_9], %11 {strides = array<i32>} : memref<1x8xf32, #tpu.memory_space<vmem>>, vector<1x8xf32>,
    return
  }
}

</mosaic_0001>

<llo_original>
// kernel: tpu_custom_call.1
$region0: #{tpu_custom_call.1}
  #allocation0 [shape = 'u32[]', space=smem, size = 0x4, offset = 0x4, fixed_abs, tag = 'smem constant byte address 0x4 - core index']
  #allocation1 [shape = 'u32[144,128]{1,0:T(1,128)}', space=vmem, size = 0x12000, scoped, tag = 'internal scratch']
  #allocation2 [shape = 'f32[1,1]{1,0:T(1,128)S(6)}', space=smem, size = 0x200, scoped, tag = 'scoped memory for tpu_custom_call.1']
  %s0 = inlined_call_operand.vmem [shape: f32[2,8], index: 0, kind: input, shape index: {}]
  %s1 = inlined_call_operand.vmem [shape: f32[1,2], index: 1, kind: input, shape index: {}]
  %s2 = inlined_call_operand.<no memory space> [shape: f32[1,1], index: 2, kind: input, shape index: {}]
  %s3 = inlined_call_operand.hbm [shape: f32[1,8], index: 3, kind: output, shape index: {}]
  %s4 = sld [smem:[#allocation0]]
  $region26: #{tpu_custom_call.1} parent=0
    _
  %s6 = ssub.s32 1, %s4
  %s7 = scalar_select 0, %s6, %s4
  %8 = sst [smem:[#allocation2]] %s2
  $region1: #{tpu_custom_call.1} parent=0
    #allocation3 [shape = 'u8[512]{0}', space=smem, size = 0x200, scoped, tag = 'input window, operand 1, single buffered']
    #allocation4 [shape = 's32[1]{0}', space=sflag, size = 0x4, scoped, tag = 'scoped memory for tpu_custom_call.1']
    #allocation5 [shape = 's32[1]{0}', space=sflag, size = 0x4, scoped, tag = 'scoped memory for tpu_custom_call.1']
    #allocation6 [shape = 'u8[512]{0}', space=vmem, size = 0x400, scoped, tag = 'output window, operand 0, single buffered']
    %9 = vsyncpa [#allocation5], 0
    %10 = vsyncpa [#allocation4], 0
    // Predicated region
    $region2: #{tpu_custom_call.1} parent=1 // pred_check
      _
    $region3: #{tpu_custom_call.1} parent=1 // pred_check_branch
      %12 = sbr.rel (0) target = $region5
    $region4: #{tpu_custom_call.1} parent=1 // pred_region
      _
    $region5: #{tpu_custom_call.1} parent=1 // pred_fallthru
      _
    // Predicated region
    $region6: #{tpu_custom_call.1} parent=1 // pred_check
      _
    $region7: #{tpu_custom_call.1} parent=1 // pred_check_branch
      %14 = sbr.rel (0) target = $region9
    $region8: #{tpu_custom_call.1} parent=1 // pred_region
      %s16 = ssub.s32 16, 16
      %17 = vsyncadd [#allocation5], %s16
      %s19 = sshll.u32 %s1, 4
      %s20 = int_to_ptr.vmem [resolvable:$true] %s19
      %22 = dma.vmem_to_smem %s20, 16, [#allocation3], [#allocation5]
    $region9: #{tpu_custom_call.1} parent=1 // pred_fallthru
      _
    // Predicated region
    $region10: #{tpu_custom_call.1} parent=1 // pred_check
      _
    $region11: #{tpu_custom_call.1} parent=1 // pred_check_branch
      %24 = sbr.rel (0) target = $region13
    $region12: #{tpu_custom_call.1} parent=1 // pred_region
      _
    $region13: #{tpu_custom_call.1} parent=1 // pred_fallthru
      _
    // Predicated region
    $region14: #{tpu_custom_call.1} parent=1 // pred_check
      _
    $region15: #{tpu_custom_call.1} parent=1 // pred_check_branch
      %26 = sbr.rel (0) target = $region17
    $region16: #{tpu_custom_call.1} parent=1 // pred_region
      %27 = dma.done [#allocation5], 16
    $region17: #{tpu_custom_call.1} parent=1 // pred_fallthru
      _
    %28 = sfence
    %s29 = sld [smem:[#allocation3]]
    %s30 = sld [smem:[#allocation3 + $0x1]]
    %s31 = sld [smem:[#allocation2]]
    %v32 = vld [vmem:[%s0] sm:$0x1]
    %v33 = vstv %s29
    %v34 = vmul.f32 %v32, %v33
    %v35 = vld [vmem:[%s0 + $0x1] sm:$0x1]
    %v36 = vstv %s30
    %v37 = vmul.f32 %v35, %v36
    %v38 = vadd.f32 %v34, %v37
    %v39 = vstv %s31
    %v40 = vadd.f32 %v38, %v39
    %vm41 = vcmask 57344
    %42 = vst.msk [vmem:[#allocation6] sm:$0x1] %vm41, %v40
    // Predicated region
    $region18: #{tpu_custom_call.1} parent=1 // pred_check
      _
    $region19: #{tpu_custom_call.1} parent=1 // pred_check_branch
      %44 = sbr.rel (0) target = $region21
    $region20: #{tpu_custom_call.1} parent=1 // pred_region
      %s46 = ssub.s32 16, 16
      %47 = vsyncadd [#allocation4], %s46
      %s49 = sshll.u32 [#allocation6], 4
      %s50 = int_to_ptr.vmem [resolvable:$true] %s49
      %52 = dma.vmem_to_hbm [thread:$0]  %s50, 16, %s3, [#allocation4]
    $region21: #{tpu_custom_call.1} parent=1 // pred_fallthru
      _
    // Predicated region
    $region22: #{tpu_custom_call.1} parent=1 // pred_check
      _
    $region23: #{tpu_custom_call.1} parent=1 // pred_check_branch
      %54 = sbr.rel (0) target = $region25
    $region24: #{tpu_custom_call.1} parent=1 // pred_region
      %55 = dma.done [#allocation4], 16
    $region25: #{tpu_custom_call.1} parent=1 // pred_fallthru
      _
    %56 = vsyncpa [#allocation4], 1
    %57 = vsyncpa [#allocation5], 1

</llo_original>
